<compile_context>
chip_gen: v7x
topology: tpu7x:2x2x1
jax: 0.10.0
libtpu: 0.0.40
codegen_flags: <defaults>
</compile_context>

<pallas_src>
import functools

import jax
import jax.numpy as jnp
import numpy as np
from jax.experimental import pallas as pl
from jax.experimental.pallas import tpu as pltpu


def _resblock_kernel(x_ref, xmask_ref, w1_ref, b1_ref, w2_ref, b2_ref,
                     out_ref, *, W):
    # x_ref    : (1, C, P)   one batch element, P = H*W (lane-dense)
    # xmask_ref: (2, P)      {0,1} masks for the x (width) boundary taps
    # w*_ref   : (C, K_pad)  bf16 weights with BN scale folded in, K_pad = rnd128(9*C)
    # b*_ref   : (C, 1)      folded inference-mode BN bias (f32)
    # out_ref  : (1, C, P)
    C = x_ref.shape[1]
    P = x_ref.shape[2]
    K_pad = w1_ref.shape[1]
    pad = W + 1                     # flat halo wide enough for any +/-(W+1) tap shift
    kpad_rows = K_pad - 9 * C

    x = x_ref[0].astype(jnp.float32)                    # (C, P) identity kept in f32
    xm = xmask_ref[...]                                 # (2, P)
    masks = {-1: xm[0:1, :], 0: None, 1: xm[1:2, :]}
    halo = jnp.zeros((C, pad), jnp.float32)

    def conv3x3(a, w_flat):
        # a: (C, P) f32 activations; w_flat: (C_out, K_pad) bf16 (BN scale folded).
        # Flat zero halo handles the y-boundaries; lane masks handle x-boundaries.
        apad = jnp.concatenate([halo, a, halo], axis=1)           # (C, P + 2W + 2)
        taps = []
        for dy in (-1, 0, 1):
            for dx in (-1, 0, 1):
                off = pad + dy * W + dx
                t = jax.lax.slice_in_dim(apad, off, off + P, axis=1)   # (C, P)
                if masks[dx] is not None:
                    t = t * masks[dx]
                taps.append(t)
        if kpad_rows:
            taps.append(jnp.zeros((kpad_rows, P), jnp.float32))
        # im2col: a single merged-K MXU dot (bf16 operands, f32 accumulation).
        patch = jnp.concatenate(taps, axis=0).astype(jnp.bfloat16)     # (K_pad, P)
        return jnp.dot(w_flat, patch, preferred_element_type=jnp.float32)  # (C, P)

    # conv1 (BN scale folded into weights) -> +bias -> ReLU   (f32 epilogue)
    y1 = jnp.maximum(conv3x3(x, w1_ref[...]) + b1_ref[...], 0.0)
    # conv2 -> +bias -> residual add -> ReLU
    y2 = conv3x3(y1, w2_ref[...]) + b2_ref[...]
    out_ref[0] = jnp.maximum(y2 + x, 0.0).astype(out_ref.dtype)


def residual_block(x_nchw, w1_hwio, s1, b1, w2_hwio, s2, b2):
    """x_nchw: (N, C, H, W) f32.  w*: (3, 3, C_in, C_out) f32 (HWIO).
    s*/b*: (C,) folded inference-mode BN scale/bias.  Returns (N, C, H, W)."""
    N, C, H, W = x_nchw.shape
    if w1_hwio.shape != (3, 3, C, C) or w2_hwio.shape != (3, 3, C, C):
        raise ValueError("Kernel requires 3x3 convs with in_channels == "
                         "out_channels (stride=1, no downsample).")
    P = H * W
    K = 9 * C
    K_pad = ((K + 127) // 128) * 128          # align contraction dim to MXU tiling

    # Free layout change: NCHW -> (N, C, H*W).  No transpose, no spatial pad.
    x_flat = x_nchw.reshape(N, C, P)

    def fold_w(w, s):
        # Fold BN scale into the conv weights (per output channel), then flatten
        # to (C_out, 9*C_in), zero-pad the contraction dim, and cast to bf16.
        wf = jnp.transpose(w * s[None, None, None, :], (3, 0, 1, 2)).reshape(C, K)
        wf = jnp.pad(wf, ((0, 0), (0, K_pad - K)))
        return wf.astype(jnp.bfloat16)

    w1f, w2f = fold_w(w1_hwio, s1), fold_w(w2_hwio, s2)
    b1c, b2c = b1.reshape(C, 1), b2.reshape(C, 1)

    # {0,1} lane masks for tap neighbours that fall off the left/right image edge.
    xs = np.arange(P) % W
    xmask = jnp.asarray(np.stack([(xs >= 1), (xs <= W - 2)]).astype(np.float32))

    kernel = functools.partial(_resblock_kernel, W=W)
    out_flat = pl.pallas_call(
        kernel,
        out_shape=jax.ShapeDtypeStruct((N, C, P), x_nchw.dtype),
        grid_spec=pltpu.PrefetchScalarGridSpec(
            num_scalar_prefetch=0,
            grid=(N,),                          # one batch element per grid step
            in_specs=[
                pl.BlockSpec((1, C, P), lambda n: (n, 0, 0)),
                pl.BlockSpec((2, P), lambda n: (0, 0)),
                pl.BlockSpec((C, K_pad), lambda n: (0, 0)),
                pl.BlockSpec((C, 1), lambda n: (0, 0)),
                pl.BlockSpec((C, K_pad), lambda n: (0, 0)),
                pl.BlockSpec((C, 1), lambda n: (0, 0)),
            ],
            out_specs=pl.BlockSpec((1, C, P), lambda n: (n, 0, 0)),
        ),
        compiler_params=pltpu.CompilerParams(
            dimension_semantics=("parallel",)),    # batch axis shards across TCs
    )(x_flat, xmask, w1f, b1c, w2f, b2c)

    return out_flat.reshape(N, C, H, W)


def _reference(x, w1, s1, b1, w2, s2, b2):
    """Pure-JAX NCHW reference using the same precision policy as the kernel
    (BN scale folded into bf16 conv weights, f32 accumulation, f32 epilogue)."""
    dn = ("NCHW", "HWIO", "NCHW")

    def conv(a, w, s):
        wf = (w * s[None, None, None, :]).astype(jnp.bfloat16)
        return jax.lax.conv_general_dilated(
            a.astype(jnp.bfloat16), wf, (1, 1), "SAME",
            dimension_numbers=dn, preferred_element_type=jnp.float32)

    o = jnp.maximum(conv(x, w1, s1) + b1[None, :, None, None], 0.0)
    o = conv(o, w2, s2) + b2[None, :, None, None]
    return jnp.maximum(o + x, 0.0)


def _make_params(key, c):
    """Deterministic conv weights (HWIO) + folded BN scale/bias (inference)."""
    ks = jax.random.split(key, 10)
    eps = 1e-5

    def fold_bn(kg, kb, km, kv):
        gamma = 1.0 + 0.1 * jax.random.normal(kg, (c,), jnp.float32)
        beta = 0.1 * jax.random.normal(kb, (c,), jnp.float32)
        mean = 0.05 * jax.random.normal(km, (c,), jnp.float32)
        var = jax.random.uniform(kv, (c,), jnp.float32, 0.5, 1.5)
        scale = gamma / jnp.sqrt(var + eps)
        bias = beta - mean * scale
        return scale, bias

    w1 = 0.1 * jax.random.normal(ks[0], (3, 3, c, c), jnp.float32)
    w2 = 0.1 * jax.random.normal(ks[1], (3, 3, c, c), jnp.float32)
    s1, b1 = fold_bn(ks[2], ks[3], ks[4], ks[5])
    s2, b2 = fold_bn(ks[6], ks[7], ks[8], ks[9])
    return w1, s1, b1, w2, s2, b2


if __name__ == "__main__":
    key = jax.random.PRNGKey(0)
    kx, kp = jax.random.split(key)

    N, C, H, W = 2, 8, 16, 16
    x = jax.random.normal(kx, (N, C, H, W), jnp.float32)
    w1, s1, b1, w2, s2, b2 = _make_params(kp, C)

    run = jax.jit(residual_block)
    out = jax.block_until_ready(run(x, w1, s1, b1, w2, s2, b2))

    ref = _reference(x, w1, s1, b1, w2, s2, b2)
    np.testing.assert_allclose(np.asarray(out), np.asarray(ref),
                               rtol=1e-2, atol=1e-2)
    print("KERNEL_OK")
</pallas_src>

<mosaic_0001>
module attributes {stable_mosaic.version = 11 : i64} {
  func.func @_resblock_kernel(%arg0: i32, %arg1: memref<1x8x256xf32, #tpu.memory_space<vmem>>, %arg2: memref<2x256xf32, #tpu.memory_space<vmem>>, %arg3: memref<8x128xbf16, #tpu.memory_space<vmem>>, %arg4: memref<8x1xf32, #tpu.memory_space<vmem>>, %arg5: memref<8x128xbf16, #tpu.memory_space<vmem>>, %arg6: memref<8x1xf32, #tpu.memory_space<vmem>>, %arg7: memref<1x8x256xf32, #tpu.memory_space<vmem>>) attributes {dimension_semantics = [#tpu.dimension_semantics<parallel>], iteration_bounds = array<i64: 2>, scalar_prefetch = 0 : i64, scratch_operands = 0 : i64, tpu.core_type = #tpu.core_type<tc>, window_params = [{transform_indices = @transform_0, window_bounds = array<i64: 1, 8, 256>}, {pipeline_mode = #tpu.pipeline_mode<synchronous>, transform_indices = @transform_1, window_bounds = array<i64: 2, 256>}, {pipeline_mode = #tpu.pipeline_mode<synchronous>, transform_indices = @transform_2, window_bounds = array<i64: 8, 128>}, {pipeline_mode = #tpu.pipeline_mode<synchronous>, transform_indices = @transform_3, window_bounds = array<i64: 8, 1>}, {pipeline_mode = #tpu.pipeline_mode<synchronous>, transform_indices = @transform_4, window_bounds = array<i64: 8, 128>}, {pipeline_mode = #tpu.pipeline_mode<synchronous>, transform_indices = @transform_5, window_bounds = array<i64: 8, 1>}, {transform_indices = @transform_6, window_bounds = array<i64: 1, 8, 256>}]} {
    %c0 = arith.constant 0 : index
    %c0_0 = arith.constant 0 : index
    %c0_1 = arith.constant 0 : index
    %0 = vector.load %arg1[%c0, %c0_0, %c0_1] : memref<1x8x256xf32, #tpu.memory_space<vmem>>, vector<1x8x256xf32>
    %1 = vector.shape_cast %0 : vector<1x8x256xf32> to vector<8x256xf32>
    %c0_2 = arith.constant 0 : index
    %c0_3 = arith.constant 0 : index
    %2 = vector.load %arg2[%c0_2, %c0_3] : memref<2x256xf32, #tpu.memory_space<vmem>>, vector<2x256xf32>
    %3 = vector.extract_strided_slice %2 {offsets = [0, 0], sizes = [1, 256], strides = [1, 1]} : vector<2x256xf32> to vector<1x256xf32>
    %4 = vector.extract_strided_slice %2 {offsets = [1, 0], sizes = [1, 256], strides = [1, 1]} : vector<2x256xf32> to vector<1x256xf32>
    %cst = arith.constant 0.000000e+00 : f32
    %5 = vector.broadcast %cst : f32 to vector<8x17xf32>
    %c0_4 = arith.constant 0 : index
    %c0_5 = arith.constant 0 : index
    %6 = vector.load %arg3[%c0_4, %c0_5] : memref<8x128xbf16, #tpu.memory_space<vmem>>, vector<8x128xbf16>
    %7 = tpu.concatenate %5, %1, %5 in 1 : vector<8x17xf32>, vector<8x256xf32>, vector<8x17xf32> -> vector<8x290xf32>
    %8 = vector.extract_strided_slice %7 {offsets = [0, 0], sizes = [8, 256], strides = [1, 1]} : vector<8x290xf32> to vector<8x256xf32>
    %9 = vector.broadcast %3 : vector<1x256xf32> to vector<8x256xf32>
    %10 = arith.mulf %8, %9 : vector<8x256xf32>
    %11 = vector.extract_strided_slice %7 {offsets = [0, 1], sizes = [8, 256], strides = [1, 1]} : vector<8x290xf32> to vector<8x256xf32>
    %12 = vector.extract_strided_slice %7 {offsets = [0, 2], sizes = [8, 256], strides = [1, 1]} : vector<8x290xf32> to vector<8x256xf32>
    %13 = vector.broadcast %4 : vector<1x256xf32> to vector<8x256xf32>
    %14 = arith.mulf %12, %13 : vector<8x256xf32>
    %15 = vector.extract_strided_slice %7 {offsets = [0, 16], sizes = [8, 256], strides = [1, 1]} : vector<8x290xf32> to vector<8x256xf32>
    %16 = vector.broadcast %3 : vector<1x256xf32> to vector<8x256xf32>
    %17 = arith.mulf %15, %16 : vector<8x256xf32>
    %18 = vector.extract_strided_slice %7 {offsets = [0, 17], sizes = [8, 256], strides = [1, 1]} : vector<8x290xf32> to vector<8x256xf32>
    %19 = vector.extract_strided_slice %7 {offsets = [0, 18], sizes = [8, 256], strides = [1, 1]} : vector<8x290xf32> to vector<8x256xf32>
    %20 = vector.broadcast %4 : vector<1x256xf32> to vector<8x256xf32>
    %21 = arith.mulf %19, %20 : vector<8x256xf32>
    %22 = vector.extract_strided_slice %7 {offsets = [0, 32], sizes = [8, 256], strides = [1, 1]} : vector<8x290xf32> to vector<8x256xf32>
    %23 = vector.broadcast %3 : vector<1x256xf32> to vector<8x256xf32>
    %24 = arith.mulf %22, %23 : vector<8x256xf32>
    %25 = vector.extract_strided_slice %7 {offsets = [0, 33], sizes = [8, 256], strides = [1, 1]} : vector<8x290xf32> to vector<8x256xf32>
    %26 = vector.extract_strided_slice %7 {offsets = [0, 34], sizes = [8, 256], strides = [1, 1]} : vector<8x290xf32> to vector<8x256xf32>
    %27 = vector.broadcast %4 : vector<1x256xf32> to vector<8x256xf32>
    %28 = arith.mulf %26, %27 : vector<8x256xf32>
    %cst_6 = arith.constant 0.000000e+00 : f32
    %29 = vector.broadcast %cst_6 : f32 to vector<56x256xf32>
    %30 = tpu.concatenate %10, %11, %14, %17, %18, %21, %24, %25, %28, %29 in 0 : vector<8x256xf32>, vector<8x256xf32>, vector<8x256xf32>, vector<8x256xf32>, vector<8x256xf32>, vector<8x256xf32>, vector<8x256xf32>, vector<8x256xf32>, vector<8x256xf32>, vector<56x256xf32> -> vector<128x256xf32>
    %31 = arith.truncf %30 : vector<128x256xf32> to vector<128x256xbf16>
    %cst_7 = arith.constant dense<0.000000e+00> : vector<8x256xf32>
    %32 = tpu.matmul %6, %31, %cst_7 {dimension_numbers = #tpu.dot_dimension_numbers<[1], [0], [0], [1], [0, 0, 1, 1], [], []>} : vector<8x128xbf16>, vector<128x256xbf16>, vector<8x256xf32> -> vector<8x256xf32>
    %c0_8 = arith.constant 0 : index
    %c0_9 = arith.constant 0 : index
    %33 = vector.load %arg4[%c0_8, %c0_9] : memref<8x1xf32, #tpu.memory_space<vmem>>, vector<8x1xf32>
    %34 = vector.broadcast %33 : vector<8x1xf32> to vector<8x256xf32>
    %35 = arith.addf %32, %34 : vector<8x256xf32>
    %cst_10 = arith.constant 0.000000e+00 : f32
    %36 = vector.broadcast %cst_10 : f32 to vector<8x256xf32>
    %37 = arith.maximumf %35, %36 : vector<8x256xf32>
    %c0_11 = arith.constant 0 : index
    %c0_12 = arith.constant 0 : index
    %38 = vector.load %arg5[%c0_11, %c0_12] : memref<8x128xbf16, #tpu.memory_space<vmem>>, vector<8x128xbf16>
    %39 = tpu.concatenate %5, %37, %5 in 1 : vector<8x17xf32>, vector<8x256xf32>, vector<8x17xf32> -> vector<8x290xf32>
    %40 = vector.extract_strided_slice %39 {offsets = [0, 0], sizes = [8, 256], strides = [1, 1]} : vector<8x290xf32> to vector<8x256xf32>
    %41 = vector.broadcast %3 : vector<1x256xf32> to vector<8x256xf32>
    %42 = arith.mulf %40, %41 : vector<8x256xf32>
    %43 = vector.extract_strided_slice %39 {offsets = [0, 1], sizes = [8, 256], strides = [1, 1]} : vector<8x290xf32> to vector<8x256xf32>
    %44 = vector.extract_strided_slice %39 {offsets = [0, 2], sizes = [8, 256], strides = [1, 1]} : vector<8x290xf32> to vector<8x256xf32>
    %45 = vector.broadcast %4 : vector<1x256xf32> to vector<8x256xf32>
    %46 = arith.mulf %44, %45 : vector<8x256xf32>
    %47 = vector.extract_strided_slice %39 {offsets = [0, 16], sizes = [8, 256], strides = [1, 1]} : vector<8x290xf32> to vector<8x256xf32>
    %48 = vector.broadcast %3 : vector<1x256xf32> to vector<8x256xf32>
    %49 = arith.mulf %47, %48 : vector<8x256xf32>
    %50 = vector.extract_strided_slice %39 {offsets = [0, 17], sizes = [8, 256], strides = [1, 1]} : vector<8x290xf32> to vector<8x256xf32>
    %51 = vector.extract_strided_slice %39 {offsets = [0, 18], sizes = [8, 256], strides = [1, 1]} : vector<8x290xf32> to vector<8x256xf32>
    %52 = vector.broadcast %4 : vector<1x256xf32> to vector<8x256xf32>
    %53 = arith.mulf %51, %52 : vector<8x256xf32>
    %54 = vector.extract_strided_slice %39 {offsets = [0, 32], sizes = [8, 256], strides = [1, 1]} : vector<8x290xf32> to vector<8x256xf32>
    %55 = vector.broadcast %3 : vector<1x256xf32> to vector<8x256xf32>
    %56 = arith.mulf %54, %55 : vector<8x256xf32>
    %57 = vector.extract_strided_slice %39 {offsets = [0, 33], sizes = [8, 256], strides = [1, 1]} : vector<8x290xf32> to vector<8x256xf32>
    %58 = vector.extract_strided_slice %39 {offsets = [0, 34], sizes = [8, 256], strides = [1, 1]} : vector<8x290xf32> to vector<8x256xf32>
    %59 = vector.broadcast %4 : vector<1x256xf32> to vector<8x256xf32>
    %60 = arith.mulf %58, %59 : vector<8x256xf32>
    %cst_13 = arith.constant 0.000000e+00 : f32
    %61 = vector.broadcast %cst_13 : f32 to vector<56x256xf32>
    %62 = tpu.concatenate %42, %43, %46, %49, %50, %53, %56, %57, %60, %61 in 0 : vector<8x256xf32>, vector<8x256xf32>, vector<8x256xf32>, vector<8x256xf32>, vector<8x256xf32>, vector<8x256xf32>, vector<8x256xf32>, vector<8x256xf32>, vector<8x256xf32>, vector<56x256xf32> -> vector<128x256xf32>
    %63 = arith.truncf %62 : vector<128x256xf32> to vector<128x256xbf16>
    %cst_14 = arith.constant dense<0.000000e+00> : vector<8x256xf32>
    %64 = tpu.matmul %38, %63, %cst_14 {dimension_numbers = #tpu.dot_dimension_numbers<[1], [0], [0], [1], [0, 0, 1, 1], [], []>} : vector<8x128xbf16>, vector<128x256xbf16>, vector<8x256xf32> -> vector<8x256xf32>
    %c0_15 = arith.constant 0 : index
    %c0_16 = arith.constant 0 : index
    %65 = vector.load %arg6[%c0_15, %c0_16] : memref<8x1xf32, #tpu.memory_space<vmem>>, vector<8x1xf32>
    %66 = vector.broadcast %65 : vector<8x1xf32> to vector<8x256xf32>
    %67 = arith.addf %64, %66 : vector<8x256xf32>
    %68 = arith.addf %67, %1 : vector<8x256xf32>
    %cst_17 = arith.constant 0.000000e+00 : f32
    %69 = vector.broadcast %cst_17 : f32 to vector<8x256xf32>
    %70 = arith.maximumf %68, %69 : vector<8x256xf32>
    %c0_18 = arith.constant 0 : index
    %c0_19 = arith.constant 0 : index
    %c0_20 = arith.constant 0 : index
    %71 = vector.load %arg7[%c0_18, %c0_19, %c0_20] : memref<1x8x256xf32, #tpu.memory_space<vmem>>, vector<1x8x256xf32>
    %72 = vector.shape_cast %71 : vector<1x8x256xf32> to vector<8x256xf32>
    %73 = vector.shape_cast %70 : vector<8x256xf32> to vector<1x8x256xf32>
    tpu.vector_store %arg7[%c0_18, %c0_19, %c0_20], %73 {strides = array<i32>} : memref<1x8x256xf32, #tpu.memory_space<vmem>>, vector<1x8x256xf32>,
    return
  }
  func.func @transform_0(%arg0: i32) -> (i32, i32, i32) {
    %c0_i32 = arith.constant 0 : i32
    %c0_i32_0 = arith.constant 0 : i32
    %c0_i32_1 = arith.constant 0 : i32
    return %arg0, %c0_i32, %c0_i32_0 : i32, i32, i32
  }
  func.func @transform_1(%arg0: i32) -> (i32, i32) {
    %c0_i32 = arith.constant 0 : i32
    %c0_i32_0 = arith.constant 0 : i32
    %c0_i32_1 = arith.constant 0 : i32
    return %c0_i32, %c0_i32_0 : i32, i32
  }
  func.func @transform_2(%arg0: i32) -> (i32, i32) {
    %c0_i32 = arith.constant 0 : i32
    %c0_i32_0 = arith.constant 0 : i32
    %c0_i32_1 = arith.constant 0 : i32
    return %c0_i32, %c0_i32_0 : i32, i32
  }
  func.func @transform_3(%arg0: i32) -> (i32, i32) {
    %c0_i32 = arith.constant 0 : i32
    %c0_i32_0 = arith.constant 0 : i32
    %c0_i32_1 = arith.constant 0 : i32
    return %c0_i32, %c0_i32_0 : i32, i32
  }
  func.func @transform_4(%arg0: i32) -> (i32, i32) {
    %c0_i32 = arith.constant 0 : i32
    %c0_i32_0 = arith.constant 0 : i32
    %c0_i32_1 = arith.constant 0 : i32
    return %c0_i32, %c0_i32_0 : i32, i32
  }
  func.func @transform_5(%arg0: i32) -> (i32, i32) {
    %c0_i32 = arith.constant 0 : i32
    %c0_i32_0 = arith.constant 0 : i32
    %c0_i32_1 = arith.constant 0 : i32
    return %c0_i32, %c0_i32_0 : i32, i32
  }
  func.func @transform_6(%arg0: i32) -> (i32, i32, i32) {
    %c0_i32 = arith.constant 0 : i32
    %c0_i32_0 = arith.constant 0 : i32
    %c0_i32_1 = arith.constant 0 : i32
    return %arg0, %c0_i32, %c0_i32_0 : i32, i32, i32
  }
}

</mosaic_0001>

<llo_original>
// kernel: residual_block.1
$region0: #{residual_block.1}
  #allocation0 [shape = 'u32[]', space=smem, size = 0x4, offset = 0x4, fixed_abs, tag = 'smem constant byte address 0x4 - core index']
  #allocation1 [shape = 'u32[144,128]{1,0:T(1,128)}', space=vmem, size = 0x12000, scoped, tag = 'internal scratch']
  %s0 = inlined_call_operand.vmem [shape: f32[2,8,256], index: 0, kind: input, shape index: {}]
  %s1 = inlined_call_operand.vmem [shape: f32[2,256], index: 1, kind: input, shape index: {}]
  %s2 = inlined_call_operand.vmem [shape: bf16[8,128], index: 2, kind: input, shape index: {}]
  %s3 = inlined_call_operand.vmem [shape: f32[8,1], index: 3, kind: input, shape index: {}]
  %s4 = inlined_call_operand.vmem [shape: bf16[8,128], index: 4, kind: input, shape index: {}]
  %s5 = inlined_call_operand.vmem [shape: f32[8,1], index: 5, kind: input, shape index: {}]
  %s6 = inlined_call_operand.vmem [shape: f32[2,8,256], index: 6, kind: output, shape index: {}]
  %s7 = sld [smem:[#allocation0]]
  $region57: #{residual_block.1} parent=0
    _
  %s9 = ssub.s32 1, %s7
  %s10 = scalar_select 0, %s9, %s7
  loop: start=0, step=1, limit=4
  $region2: #{residual_block.1} parent=0 // loop_pre_header
    _
  $region3: #{residual_block.1} parent=0 // loop_header
    %s12 = sphi 0, %s16
    %p13 = scmp.ge.s32.totalorder %s12, 4
    %s22 = sphi 0, %s24
    %s25 = sphi 0, %s22
    %s26 = sphi 0, %s25
    %s42 = sphi 0, %s26
    %s46 = sphi 0, %s46
    %s48 = sphi 0, %s46
    %s49 = sphi 0, %s48
    %s63 = sphi 0, %s49
    %s67 = sphi 0, %s67
    %s69 = sphi 0, %s67
    %s70 = sphi 0, %s69
    %s84 = sphi 0, %s70
    %s88 = sphi 0, %s88
    %s90 = sphi 0, %s88
    %s91 = sphi 0, %s90
    %s105 = sphi 0, %s91
    %s109 = sphi 0, %s109
    %s111 = sphi 0, %s109
    %s112 = sphi 0, %s111
    %s126 = sphi 0, %s112
    %s130 = sphi 0, %s130
    %s132 = sphi 0, %s130
    %s133 = sphi 0, %s132
    %s147 = sphi 0, %s133
    %s153 = sphi 0, %s155
    %s156 = sphi 0, %s153
    %s157 = sphi 0, %s156
    %s173 = sphi 0, %s157
  $region4: #{residual_block.1} parent=0 // loop_header_branch
    %15 = sbr.rel (%p13) target = $region8
  $region5: #{residual_block.1} parent=0 // loop_body
    %s17 = ssub.s32 %s12, 1
    %s18 = ssub.s32 %s12, 2
    %s19 = sadd.s32 %s12, 1
    %s20 = ssub.s32 %s12, %s19
    %p21 = scmp.eq.s32.totalorder %s20, 0
    %s23 = sadd.s32 %s22, 1
    %s24 = scalar_select %p21, %s22, %s23
    %p27 = pneg %p21
    %p28 = scmp.eq.s32.totalorder %s12, 1
    %p29 = por %p27, %p28
    %p30 = scmp.ne.s32.totalorder %s22, %s25
    %p31 = scmp.eq.s32.totalorder %s12, 0
    %p32 = por %p30, %p31
    %p33 = scmp.ne.s32.totalorder %s22, %s25
    %p34 = scmp.eq.s32.totalorder %s17, 1
    %p35 = por %p33, %p34
    %p36 = scmp.ne.s32.totalorder %s25, %s26
    %p37 = scmp.eq.s32.totalorder %s17, 0
    %p38 = por %p36, %p37
    %p39 = scmp.ne.s32.totalorder %s25, %s26
    %p40 = scmp.eq.s32.totalorder %s18, 1
    %p41 = por %p39, %p40
    %p43 = scmp.ne.s32.totalorder %s26, %s42
    %p44 = scmp.eq.s32.totalorder %s18, 0
    %p45 = por %p43, %p44
    %s47 = sadd.s32 %s46, 1
    %p50 = scmp.eq.s32.totalorder %s12, 1
    %p51 = scmp.ne.s32.totalorder %s46, %s48
    %p52 = scmp.eq.s32.totalorder %s12, 0
    %p53 = por %p51, %p52
    %p54 = scmp.ne.s32.totalorder %s46, %s48
    %p55 = scmp.eq.s32.totalorder %s17, 1
    %p56 = por %p54, %p55
    %p57 = scmp.ne.s32.totalorder %s48, %s49
    %p58 = scmp.eq.s32.totalorder %s17, 0
    %p59 = por %p57, %p58
    %p60 = scmp.ne.s32.totalorder %s48, %s49
    %p61 = scmp.eq.s32.totalorder %s18, 1
    %p62 = por %p60, %p61
    %p64 = scmp.ne.s32.totalorder %s49, %s63
    %p65 = scmp.eq.s32.totalorder %s18, 0
    %p66 = por %p64, %p65
    %s68 = sadd.s32 %s67, 1
    %p71 = scmp.eq.s32.totalorder %s12, 1
    %p72 = scmp.ne.s32.totalorder %s67, %s69
    %p73 = scmp.eq.s32.totalorder %s12, 0
    %p74 = por %p72, %p73
    %p75 = scmp.ne.s32.totalorder %s67, %s69
    %p76 = scmp.eq.s32.totalorder %s17, 1
    %p77 = por %p75, %p76
    %p78 = scmp.ne.s32.totalorder %s69, %s70
    %p79 = scmp.eq.s32.totalorder %s17, 0
    %p80 = por %p78, %p79
    %p81 = scmp.ne.s32.totalorder %s69, %s70
    %p82 = scmp.eq.s32.totalorder %s18, 1
    %p83 = por %p81, %p82
    %p85 = scmp.ne.s32.totalorder %s70, %s84
    %p86 = scmp.eq.s32.totalorder %s18, 0
    %p87 = por %p85, %p86
    %s89 = sadd.s32 %s88, 1
    %p92 = scmp.eq.s32.totalorder %s12, 1
    %p93 = scmp.ne.s32.totalorder %s88, %s90
    %p94 = scmp.eq.s32.totalorder %s12, 0
    %p95 = por %p93, %p94
    %p96 = scmp.ne.s32.totalorder %s88, %s90
    %p97 = scmp.eq.s32.totalorder %s17, 1
    %p98 = por %p96, %p97
    %p99 = scmp.ne.s32.totalorder %s90, %s91
    %p100 = scmp.eq.s32.totalorder %s17, 0
    %p101 = por %p99, %p100
    %p102 = scmp.ne.s32.totalorder %s90, %s91
    %p103 = scmp.eq.s32.totalorder %s18, 1
    %p104 = por %p102, %p103
    %p106 = scmp.ne.s32.totalorder %s91, %s105
    %p107 = scmp.eq.s32.totalorder %s18, 0
    %p108 = por %p106, %p107
    %s110 = sadd.s32 %s109, 1
    %p113 = scmp.eq.s32.totalorder %s12, 1
    %p114 = scmp.ne.s32.totalorder %s109, %s111
    %p115 = scmp.eq.s32.totalorder %s12, 0
    %p116 = por %p114, %p115
    %p117 = scmp.ne.s32.totalorder %s109, %s111
    %p118 = scmp.eq.s32.totalorder %s17, 1
    %p119 = por %p117, %p118
    %p120 = scmp.ne.s32.totalorder %s111, %s112
    %p121 = scmp.eq.s32.totalorder %s17, 0
    %p122 = por %p120, %p121
    %p123 = scmp.ne.s32.totalorder %s111, %s112
    %p124 = scmp.eq.s32.totalorder %s18, 1
    %p125 = por %p123, %p124
    %p127 = scmp.ne.s32.totalorder %s112, %s126
    %p128 = scmp.eq.s32.totalorder %s18, 0
    %p129 = por %p127, %p128
    %s131 = sadd.s32 %s130, 1
    %p134 = scmp.eq.s32.totalorder %s12, 1
    %p135 = scmp.ne.s32.totalorder %s130, %s132
    %p136 = scmp.eq.s32.totalorder %s12, 0
    %p137 = por %p135, %p136
    %p138 = scmp.ne.s32.totalorder %s130, %s132
    %p139 = scmp.eq.s32.totalorder %s17, 1
    %p140 = por %p138, %p139
    %p141 = scmp.ne.s32.totalorder %s132, %s133
    %p142 = scmp.eq.s32.totalorder %s17, 0
    %p143 = por %p141, %p142
    %p144 = scmp.ne.s32.totalorder %s132, %s133
    %p145 = scmp.eq.s32.totalorder %s18, 1
    %p146 = por %p144, %p145
    %p148 = scmp.ne.s32.totalorder %s133, %s147
    %p149 = scmp.eq.s32.totalorder %s18, 0
    %p150 = por %p148, %p149
    %s151 = ssub.s32 %s12, %s19
    %p152 = scmp.eq.s32.totalorder %s151, 0
    %s154 = sadd.s32 %s153, 1
    %s155 = scalar_select %p152, %s153, %s154
    %p158 = pneg %p152
    %p159 = scmp.eq.s32.totalorder %s12, 1
    %p160 = por %p158, %p159
    %p161 = scmp.ne.s32.totalorder %s153, %s156
    %p162 = scmp.eq.s32.totalorder %s12, 0
    %p163 = por %p161, %p162
    %p164 = scmp.ne.s32.totalorder %s153, %s156
    %p165 = scmp.eq.s32.totalorder %s17, 1
    %p166 = por %p164, %p165
    %p167 = scmp.ne.s32.totalorder %s156, %s157
    %p168 = scmp.eq.s32.totalorder %s17, 0
    %p169 = por %p167, %p168
    %p170 = scmp.ne.s32.totalorder %s156, %s157
    %p171 = scmp.eq.s32.totalorder %s18, 1
    %p172 = por %p170, %p171
    %p174 = scmp.ne.s32.totalorder %s157, %s173
    %p175 = scmp.eq.s32.totalorder %s18, 0
    %p176 = por %p174, %p175
    %p177 = scmp.le.s32.totalorder 1, %s12
    %p178 = scmp.lt.s32.totalorder %s12, 3
    %p179 = pnand %p177, %p178
    %p180 = pneg %p179
    // Predicated region
    $region9: #{residual_block.1} parent=5 // pred_check
      _
    $region10: #{residual_block.1} parent=5 // pred_check_branch
      %182 = sbr.rel (%p179) target = $region12
    $region11: #{residual_block.1} parent=5 // pred_region
      %s183 = ssub.s32 %s12, 1
      // Predicated region
      $region13: #{residual_block.1} parent=11 // pred_check
        %p184 = pneg %p59
      $region14: #{residual_block.1} parent=11 // pred_check_branch
        %186 = sbr.rel (%p184) target = $region16
      $region15: #{residual_block.1} parent=11 // pred_region
        _
      $region16: #{residual_block.1} parent=11 // pred_fallthru
        _
      // Predicated region
      $region17: #{residual_block.1} parent=11 // pred_check
        %p187 = pneg %p80
      $region18: #{residual_block.1} parent=11 // pred_check_branch
        %189 = sbr.rel (%p187) target = $region20
      $region19: #{residual_block.1} parent=11 // pred_region
        _
      $region20: #{residual_block.1} parent=11 // pred_fallthru
        _
      // Predicated region
      $region21: #{residual_block.1} parent=11 // pred_check
        %p190 = pneg %p101
      $region22: #{residual_block.1} parent=11 // pred_check_branch
        %192 = sbr.rel (%p190) target = $region24
      $region23: #{residual_block.1} parent=11 // pred_region
        _
      $region24: #{residual_block.1} parent=11 // pred_fallthru
        _
      // Predicated region
      $region25: #{residual_block.1} parent=11 // pred_check
        %p193 = pneg %p122
      $region26: #{residual_block.1} parent=11 // pred_check_branch
        %195 = sbr.rel (%p193) target = $region28
      $region27: #{residual_block.1} parent=11 // pred_region
        _
      $region28: #{residual_block.1} parent=11 // pred_fallthru
        _
      // Predicated region
      $region29: #{residual_block.1} parent=11 // pred_check
        %p196 = pneg %p143
      $region30: #{residual_block.1} parent=11 // pred_check_branch
        %198 = sbr.rel (%p196) target = $region32
      $region31: #{residual_block.1} parent=11 // pred_region
        _
      $region32: #{residual_block.1} parent=11 // pred_fallthru
        _
    $region12: #{residual_block.1} parent=5 // pred_fallthru
      _
    %p199 = scmp.lt.s32.totalorder %s12, 2
    // Predicated region
    $region33: #{residual_block.1} parent=5 // pred_check
      %p200 = pneg %p199
    $region34: #{residual_block.1} parent=5 // pred_check_branch
      %202 = sbr.rel (%p200) target = $region36
    $region35: #{residual_block.1} parent=5 // pred_region
      // Predicated region
      $region37: #{residual_block.1} parent=35 // pred_check
        %p203 = pneg %p32
      $region38: #{residual_block.1} parent=35 // pred_check_branch
        %205 = sbr.rel (%p203) target = $region40
      $region39: #{residual_block.1} parent=35 // pred_region
        %p206 = scmp.lt.s32.totalorder %s12, 1
        %s207 = scalar_select %p206, %s12, 1
        %s208 = smul.addr %s207, 2
        %s209 = smul.addr %s208, 8
        %s210 = scalar_lea.vmem %s0, %s209
      $region40: #{residual_block.1} parent=35 // pred_fallthru
        _
    $region36: #{residual_block.1} parent=5 // pred_fallthru
      _
    %p211 = scmp.le.s32.totalorder 1, %s12
    %p212 = scmp.lt.s32.totalorder %s12, 3
    %p213 = pnand %p211, %p212
    %p214 = pneg %p213
    // Predicated region
    $region41: #{residual_block.1} parent=5 // pred_check
      _
    $region42: #{residual_block.1} parent=5 // pred_check_branch
      %216 = sbr.rel (%p213) target = $region44
    $region43: #{residual_block.1} parent=5 // pred_region
      %s217 = ssub.s32 %s12, 1
      %p218 = scmp.lt.s32.totalorder %s17, 1
      %s219 = scalar_select %p218, %s17, 1
      %s220 = smul.addr %s219, 2
      %s221 = smul.addr %s220, 8
      %s222 = scalar_lea.vmem %s0, %s221
      %p223 = pneg %p38
      %p224 = pneg %p35
      %p225 = pneg %p59
      %p226 = pneg %p56
      %p227 = pneg %p80
      %p228 = pneg %p77
      %p229 = pneg %p101
      %p230 = pneg %p98
      %p231 = pneg %p122
      %p232 = pneg %p119
      %p233 = pneg %p143
      %p234 = pneg %p140
      %p235 = pneg %p169
      %p236 = pneg %p166
      %p237 = scmp.lt.s32.totalorder %s17, 1
      %s238 = scalar_select %p237, %s17, 1
      %s239 = smul.addr %s238, 2
      %s240 = smul.addr %s239, 8
      %s241 = scalar_lea.vmem %s6, %s240
      %p242 = scmp.lt.s32.totalorder %s17, 1
      %s243 = scalar_select %p242, %s17, 1
      %s244 = smul.addr %s243, 2
      %s245 = smul.addr %s244, 8
      %s246 = scalar_lea.vmem %s0, %s245
      %p247 = scmp.lt.s32.totalorder %s17, 1
      %s248 = scalar_select %p247, %s17, 1
      %s249 = smul.addr %s248, 2
      %s250 = smul.addr %s249, 8
      %s251 = scalar_lea.vmem %s6, %s250
      %v253 = vld [vmem:[%s246] sm:$0xff]
      %v254 = vld [vmem:[%s246 + $0x8] sm:$0xff]
      %v255 = vld [vmem:[%s1] sm:$0xf]
      %v256 = vld [vmem:[%s2] sm:$0xf]
      %259 = vrot.lane.b32.xlu0 %v253, 17
      %v260 = vpop.permute.xlu0 %259
      %261 = vrot.lane.b32.xlu0 %v254, 17
      %v262 = vpop.permute.xlu0 %261
      %vm263 = vcmask 138240
      %v264 = vsel %vm263, %v260, %v262
      %v268 = vsel %vm263, 0.0, %v260
      %v269 = vsel %vm263, %v262, 0.0
      %v271 = vlaneseq
      %v272 = vshrl.u32 %v271, 7
      %v273 = vsub.s32 0, %v272
      %v274 = vrot.slane %v255, %v273
      %v275 = vlaneseq
      %v276 = vshrl.u32 %v275, 7
      %v277 = vsub.s32 2, %v276
      %v278 = vrot.slane %v255, %v277
      %v281 = vlaneseq
      %v282 = vshrl.u32 %v281, 7
      %v283 = vsub.s32 0, %v282
      %v284 = vrot.slane %v274, %v283
      %v285 = vlaneseq
      %v286 = vshrl.u32 %v285, 7
      %v287 = vsub.s32 0, %v286
      %v288 = vrot.slane %v278, %v287
      %v289 = vmul.f32 %v268, %v284
      %v290 = vmul.f32 %v264, %v288
      %v291 = vlaneseq
      %v292 = vshrl.u32 %v291, 7
      %v293 = vsub.s32 1, %v292
      %v294 = vrot.slane %v255, %v293
      %v295 = vlaneseq
      %v296 = vshrl.u32 %v295, 7
      %v297 = vsub.s32 3, %v296
      %v298 = vrot.slane %v255, %v297
      %v301 = vlaneseq
      %v302 = vshrl.u32 %v301, 7
      %v303 = vsub.s32 1, %v302
      %v304 = vrot.slane %v294, %v303
      %v305 = vlaneseq
      %v306 = vshrl.u32 %v305, 7
      %v307 = vsub.s32 1, %v306
      %v308 = vrot.slane %v298, %v307
      %311 = vrot.lane.b32.xlu0 %v304, 2
      %v312 = vpop.permute.xlu0 %311
      %313 = vrot.lane.b32.xlu0 %v308, 2
      %v314 = vpop.permute.xlu0 %313
      %vm315 = vcmask 15360
      %v316 = vsel %vm315, %v312, %v314
      %v320 = vmul.f32 %v268, %v312
      %v321 = vmul.f32 %v264, %v316
      %v322 = vmul.f32 %v269, %v314
      %325 = vrot.lane.b32.xlu0 %v284, 16
      %v326 = vpop.permute.xlu0 %325
      %327 = vrot.lane.b32.xlu0 %v288, 16
      %v328 = vpop.permute.xlu0 %327
      %vm329 = vcmask 130048
      %v330 = vsel %vm329, %v326, %v328
      %v334 = vmul.f32 %v268, %v326
      %v335 = vmul.f32 %v264, %v330
      %v336 = vmul.f32 %v269, %v328
      %337 = vrot.lane.b32.xlu0 %v304, 18
      %v338 = vpop.permute.xlu0 %337
      %339 = vrot.lane.b32.xlu0 %v308, 18
      %v340 = vpop.permute.xlu0 %339
      %vm341 = vcmask 146432
      %v342 = vsel %vm341, %v338, %v340
      %v346 = vmul.f32 %v268, %v338
      %v347 = vmul.f32 %v264, %v342
      %v348 = vmul.f32 %v269, %v340
      %349 = vrot.lane.b32.xlu0 %v284, 32
      %v350 = vpop.permute.xlu0 %349
      %351 = vrot.lane.b32.xlu0 %v288, 32
      %v352 = vpop.permute.xlu0 %351
      %vm353 = vcmask 261120
      %v354 = vsel %vm353, %v350, %v352
      %v358 = vmul.f32 %v268, %v350
      %v359 = vmul.f32 %v264, %v354
      %v360 = vmul.f32 %v269, %v352
      %361 = vrot.lane.b32.xlu0 %v304, 34
      %v362 = vpop.permute.xlu0 %361
      %363 = vrot.lane.b32.xlu0 %v308, 34
      %v364 = vpop.permute.xlu0 %363
      %vm365 = vcmask 277504
      %v366 = vsel %vm365, %v362, %v364
      %v370 = vmul.f32 %v268, %v362
      %v371 = vmul.f32 %v264, %v366
      %v372 = vmul.f32 %v269, %v364
      %375 = vrot.lane.b32.xlu0 %v268, 127
      %v376 = vpop.permute.xlu0 %375
      %377 = vrot.lane.b32.xlu0 %v264, 127
      %v378 = vpop.permute.xlu0 %377
      %379 = vrot.lane.b32.xlu0 %v269, 127
      %v380 = vpop.permute.xlu0 %379
      %vm381 = vcmask 1039360
      %v382 = vsel %vm381, %v376, %v378
      %v383 = vsel %vm381, %v378, %v380
      %389 = vrot.lane.b32.xlu0 %v320, 126
      %v390 = vpop.permute.xlu0 %389
      %391 = vrot.lane.b32.xlu0 %v321, 126
      %v392 = vpop.permute.xlu0 %391
      %393 = vrot.lane.b32.xlu0 %v322, 126
      %v394 = vpop.permute.xlu0 %393
      %vm395 = vcmask 1031168
      %v396 = vsel %vm395, %v390, %v392
      %v397 = vsel %vm395, %v392, %v394
      %403 = vrot.lane.b32.xlu0 %v334, 112
      %v404 = vpop.permute.xlu0 %403
      %405 = vrot.lane.b32.xlu0 %v335, 112
      %v406 = vpop.permute.xlu0 %405
      %407 = vrot.lane.b32.xlu0 %v336, 112
      %v408 = vpop.permute.xlu0 %407
      %vm409 = vcmask 916480
      %v410 = vsel %vm409, %v404, %v406
      %v411 = vsel %vm409, %v406, %v408
      %414 = vrot.lane.b32.xlu0 %v268, 111
      %v415 = vpop.permute.xlu0 %414
      %416 = vrot.lane.b32.xlu0 %v264, 111
      %v417 = vpop.permute.xlu0 %416
      %418 = vrot.lane.b32.xlu0 %v269, 111
      %v419 = vpop.permute.xlu0 %418
      %vm420 = vcmask 908288
      %v421 = vsel %vm420, %v415, %v417
      %v422 = vsel %vm420, %v417, %v419
      %428 = vrot.lane.b32.xlu0 %v346, 110
      %v429 = vpop.permute.xlu0 %428
      %430 = vrot.lane.b32.xlu0 %v347, 110
      %v431 = vpop.permute.xlu0 %430
      %432 = vrot.lane.b32.xlu0 %v348, 110
      %v433 = vpop.permute.xlu0 %432
      %vm434 = vcmask 900096
      %v435 = vsel %vm434, %v429, %v431
      %v436 = vsel %vm434, %v431, %v433
      %442 = vrot.lane.b32.xlu0 %v358, 96
      %v443 = vpop.permute.xlu0 %442
      %444 = vrot.lane.b32.xlu0 %v359, 96
      %v445 = vpop.permute.xlu0 %444
      %446 = vrot.lane.b32.xlu0 %v360, 96
      %v447 = vpop.permute.xlu0 %446
      %vm448 = vcmask 785408
      %v449 = vsel %vm448, %v443, %v445
      %v450 = vsel %vm448, %v445, %v447
      %453 = vrot.lane.b32.xlu0 %v268, 95
      %v454 = vpop.permute.xlu0 %453
      %455 = vrot.lane.b32.xlu0 %v264, 95
      %v456 = vpop.permute.xlu0 %455
      %457 = vrot.lane.b32.xlu0 %v269, 95
      %v458 = vpop.permute.xlu0 %457
      %vm459 = vcmask 777216
      %v460 = vsel %vm459, %v454, %v456
      %v461 = vsel %vm459, %v456, %v458
      %467 = vrot.lane.b32.xlu0 %v370, 94
      %v468 = vpop.permute.xlu0 %467
      %469 = vrot.lane.b32.xlu0 %v371, 94
      %v470 = vpop.permute.xlu0 %469
      %471 = vrot.lane.b32.xlu0 %v372, 94
      %v472 = vpop.permute.xlu0 %471
      %vm473 = vcmask 769024
      %v474 = vsel %vm473, %v468, %v470
      %v475 = vsel %vm473, %v470, %v472
      %v478 = vpack.c.bf16 %v382, %v289
      %v479 = vpack.c.bf16 %v383, %v290
      %v480 = vpack.c.bf16 %v410, %v396
      %v481 = vpack.c.bf16 %v411, %v397
      %v482 = vpack.c.bf16 %v435, %v421
      %v483 = vpack.c.bf16 %v436, %v422
      %v484 = vpack.c.bf16 %v460, %v449
      %v485 = vpack.c.bf16 %v461, %v450
      %v486 = vpack.c.bf16 0.0, %v474
      %v487 = vpack.c.bf16 0.0, %v475
      %v488 = vpack.c.bf16 0.0, 0.0
      %v489 = vld [vmem:[%s3] sm:$0xff]
      %491 = vset.pattern.permute.xlu0 0
      %492 = vperm.xlu0 %491, %v489
      %v493 = vpop.permute.xlu0 %492
      %495 = vmatprep.subr.bf16.mxu0 %v479
      %496 = vmatpush1.bf16.msra.mxu0 %v478
      %497 = vmatprep.subr.bf16.mxu0 %v481
      %498 = vmatpush1.bf16.msra.mxu0 %v480
      %499 = vmatprep.subr.bf16.mxu0 %v483
      %500 = vmatpush1.bf16.msra.mxu0 %v482
      %501 = vmatprep.subr.bf16.mxu0 %v485
      %502 = vmatpush1.bf16.msra.mxu0 %v484
      %503 = vmatprep.subr.bf16.mxu0 %v487
      %504 = vmatpush1.bf16.msra.mxu0 %v486
      %505 = vmatprep.subr.bf16.mxu0 %v488
      %506 = vmatpush1.bf16.msra.mxu0 %v488
      %507 = vmatprep.subr.bf16.mxu0 %v488
      %508 = vmatpush1.bf16.msra.mxu0 %v488
      %509 = vmatprep.subr.bf16.mxu0 %v488
      %510 = vmatpush1.bf16.msra.mxu0 %v488
      %511 = vmatprep.subr.bf16.mxu0 0
      %512 = vmatpush1.bf16.msra.mxu0 0
      %513 = vmatprep.subr.bf16.mxu0 0
      %514 = vmatpush1.bf16.msra.mxu0 0
      %515 = vmatprep.subr.bf16.mxu0 0
      %516 = vmatpush1.bf16.msra.mxu0 0
      %517 = vmatprep.subr.bf16.mxu0 0
      %518 = vmatpush1.bf16.msra.mxu0 0
      %519 = vmatprep.subr.bf16.mxu0 0
      %520 = vmatpush1.bf16.msra.mxu0 0
      %521 = vmatprep.subr.bf16.mxu0 0
      %522 = vmatpush1.bf16.msra.mxu0 0
      %523 = vmatprep.subr.bf16.mxu0 0
      %524 = vmatpush1.bf16.msra.mxu0 0
      %525 = vmatprep.subr.bf16.mxu0 0
      %526 = vmatpush1.bf16.msra.mxu0 0
      %527 = vmatprep.mubr.bf16.mxu0 0
      %528 = vmatmul.mubr.bf16.gmra.mrb[0].mxu0 %v256
      %v529 = vpop.f32.mrb[0].mxu0
      %v530 = vadd.f32 %v493, %v529
      %v531 = vpop.f32.mrb[0].mxu0
      %v532 = vadd.f32 %v493, %v531
      %v533 = vpop.f32.mrb[0].mxu0
      %v534 = vpop.f32.mrb[0].mxu0
      %535 = vdwg.mxu0
      %v536 = vmax.f32 %v530, 0.0
      %v537 = vmax.f32 %v532, 0.0
      %v538 = vld [vmem:[%s4] sm:$0xf]
      %541 = vrot.lane.b32.xlu0 %v536, 17
      %v542 = vpop.permute.xlu0 %541
      %543 = vrot.lane.b32.xlu0 %v537, 17
      %v544 = vpop.permute.xlu0 %543
      %v545 = vsel %vm263, %v542, %v544
      %v549 = vsel %vm263, 0.0, %v542
      %v550 = vsel %vm263, %v544, 0.0
      %v551 = vmul.f32 %v549, %v284
      %v552 = vmul.f32 %v545, %v288
      %v553 = vmul.f32 %v549, %v312
      %v554 = vmul.f32 %v545, %v316
      %v555 = vmul.f32 %v550, %v314
      %v556 = vmul.f32 %v549, %v326
      %v557 = vmul.f32 %v545, %v330
      %v558 = vmul.f32 %v550, %v328
      %v559 = vmul.f32 %v549, %v338
      %v560 = vmul.f32 %v545, %v342
      %v561 = vmul.f32 %v550, %v340
      %v562 = vmul.f32 %v549, %v350
      %v563 = vmul.f32 %v545, %v354
      %v564 = vmul.f32 %v550, %v352
      %v565 = vmul.f32 %v549, %v362
      %v566 = vmul.f32 %v545, %v366
      %v567 = vmul.f32 %v550, %v364
      %570 = vrot.lane.b32.xlu0 %v549, 127
      %v571 = vpop.permute.xlu0 %570
      %572 = vrot.lane.b32.xlu0 %v545, 127
      %v573 = vpop.permute.xlu0 %572
      %574 = vrot.lane.b32.xlu0 %v550, 127
      %v575 = vpop.permute.xlu0 %574
      %v576 = vsel %vm381, %v571, %v573
      %v577 = vsel %vm381, %v573, %v575
      %583 = vrot.lane.b32.xlu0 %v553, 126
      %v584 = vpop.permute.xlu0 %583
      %585 = vrot.lane.b32.xlu0 %v554, 126
      %v586 = vpop.permute.xlu0 %585
      %587 = vrot.lane.b32.xlu0 %v555, 126
      %v588 = vpop.permute.xlu0 %587
      %v589 = vsel %vm395, %v584, %v586
      %v590 = vsel %vm395, %v586, %v588
      %596 = vrot.lane.b32.xlu0 %v556, 112
      %v597 = vpop.permute.xlu0 %596
      %598 = vrot.lane.b32.xlu0 %v557, 112
      %v599 = vpop.permute.xlu0 %598
      %600 = vrot.lane.b32.xlu0 %v558, 112
      %v601 = vpop.permute.xlu0 %600
      %v602 = vsel %vm409, %v597, %v599
      %v603 = vsel %vm409, %v599, %v601
      %606 = vrot.lane.b32.xlu0 %v549, 111
      %v607 = vpop.permute.xlu0 %606
      %608 = vrot.lane.b32.xlu0 %v545, 111
      %v609 = vpop.permute.xlu0 %608
      %610 = vrot.lane.b32.xlu0 %v550, 111
      %v611 = vpop.permute.xlu0 %610
      %v612 = vsel %vm420, %v607, %v609
      %v613 = vsel %vm420, %v609, %v611
      %619 = vrot.lane.b32.xlu0 %v559, 110
      %v620 = vpop.permute.xlu0 %619
      %621 = vrot.lane.b32.xlu0 %v560, 110
      %v622 = vpop.permute.xlu0 %621
      %623 = vrot.lane.b32.xlu0 %v561, 110
      %v624 = vpop.permute.xlu0 %623
      %v625 = vsel %vm434, %v620, %v622
      %v626 = vsel %vm434, %v622, %v624
      %632 = vrot.lane.b32.xlu0 %v562, 96
      %v633 = vpop.permute.xlu0 %632
      %634 = vrot.lane.b32.xlu0 %v563, 96
      %v635 = vpop.permute.xlu0 %634
      %636 = vrot.lane.b32.xlu0 %v564, 96
      %v637 = vpop.permute.xlu0 %636
      %v638 = vsel %vm448, %v633, %v635
      %v639 = vsel %vm448, %v635, %v637
      %642 = vrot.lane.b32.xlu0 %v549, 95
      %v643 = vpop.permute.xlu0 %642
      %644 = vrot.lane.b32.xlu0 %v545, 95
      %v645 = vpop.permute.xlu0 %644
      %646 = vrot.lane.b32.xlu0 %v550, 95
      %v647 = vpop.permute.xlu0 %646
      %v648 = vsel %vm459, %v643, %v645
      %v649 = vsel %vm459, %v645, %v647
      %655 = vrot.lane.b32.xlu0 %v565, 94
      %v656 = vpop.permute.xlu0 %655
      %657 = vrot.lane.b32.xlu0 %v566, 94
      %v658 = vpop.permute.xlu0 %657
      %659 = vrot.lane.b32.xlu0 %v567, 94
      %v660 = vpop.permute.xlu0 %659
      %v661 = vsel %vm473, %v656, %v658
      %v662 = vsel %vm473, %v658, %v660
      %v665 = vpack.c.bf16 %v576, %v551
      %v666 = vpack.c.bf16 %v577, %v552
      %v667 = vpack.c.bf16 %v602, %v589
      %v668 = vpack.c.bf16 %v603, %v590
      %v669 = vpack.c.bf16 %v625, %v612
      %v670 = vpack.c.bf16 %v626, %v613
      %v671 = vpack.c.bf16 %v648, %v638
      %v672 = vpack.c.bf16 %v649, %v639
      %v673 = vpack.c.bf16 0.0, %v661
      %v674 = vpack.c.bf16 0.0, %v662
      %v675 = vld [vmem:[%s5] sm:$0xff]
      %677 = vset.pattern.permute.xlu0 0
      %678 = vperm.xlu0 %677, %v675
      %v679 = vpop.permute.xlu0 %678
      %681 = vmatprep.subr.bf16.mxu0 %v666
      %682 = vmatpush1.bf16.msra.mxu0 %v665
      %683 = vmatprep.subr.bf16.mxu0 %v668
      %684 = vmatpush1.bf16.msra.mxu0 %v667
      %685 = vmatprep.subr.bf16.mxu0 %v670
      %686 = vmatpush1.bf16.msra.mxu0 %v669
      %687 = vmatprep.subr.bf16.mxu0 %v672
      %688 = vmatpush1.bf16.msra.mxu0 %v671
      %689 = vmatprep.subr.bf16.mxu0 %v674
      %690 = vmatpush1.bf16.msra.mxu0 %v673
      %691 = vmatprep.subr.bf16.mxu0 %v488
      %692 = vmatpush1.bf16.msra.mxu0 %v488
      %693 = vmatprep.subr.bf16.mxu0 %v488
      %694 = vmatpush1.bf16.msra.mxu0 %v488
      %695 = vmatprep.subr.bf16.mxu0 %v488
      %696 = vmatpush1.bf16.msra.mxu0 %v488
      %697 = vmatprep.subr.bf16.mxu0 0
      %698 = vmatpush1.bf16.msra.mxu0 0
      %699 = vmatprep.subr.bf16.mxu0 0
      %700 = vmatpush1.bf16.msra.mxu0 0
      %701 = vmatprep.subr.bf16.mxu0 0
      %702 = vmatpush1.bf16.msra.mxu0 0
      %703 = vmatprep.subr.bf16.mxu0 0
      %704 = vmatpush1.bf16.msra.mxu0 0
      %705 = vmatprep.subr.bf16.mxu0 0
      %706 = vmatpush1.bf16.msra.mxu0 0
      %707 = vmatprep.subr.bf16.mxu0 0
      %708 = vmatpush1.bf16.msra.mxu0 0
      %709 = vmatprep.subr.bf16.mxu0 0
      %710 = vmatpush1.bf16.msra.mxu0 0
      %711 = vmatprep.subr.bf16.mxu0 0
      %712 = vmatpush1.bf16.msra.mxu0 0
      %713 = vmatprep.mubr.bf16.mxu0 0
      %714 = vmatmul.mubr.bf16.gmra.mrb[0].mxu0 %v538
      %v715 = vpop.f32.mrb[0].mxu0
      %v716 = vadd.f32 %v679, %v715
      %v717 = vpop.f32.mrb[0].mxu0
      %v718 = vadd.f32 %v679, %v717
      %v719 = vpop.f32.mrb[0].mxu0
      %v720 = vpop.f32.mrb[0].mxu0
      %721 = vdwg.mxu0
      %v722 = vadd.f32 %v716, %v253
      %v723 = vadd.f32 %v718, %v254
      %v724 = vmax.f32 %v722, 0.0
      %v725 = vmax.f32 %v723, 0.0
      %726 = vst [vmem:[%s251] sm:$0xff] %v724
      %727 = vst [vmem:[%s251 + $0x8] sm:$0xff] %v725
      %p728 = scmp.lt.s32.totalorder %s17, 1
      %s729 = scalar_select %p728, %s17, 1
      %s730 = smul.addr %s729, 2
      %s731 = smul.addr %s730, 8
      %s732 = scalar_lea.vmem %s6, %s731
      // Predicated region
      $region45: #{residual_block.1} parent=43 // pred_check
        %p733 = pneg %p166
      $region46: #{residual_block.1} parent=43 // pred_check_branch
        %735 = sbr.rel (%p733) target = $region48
      $region47: #{residual_block.1} parent=43 // pred_region
        _
      $region48: #{residual_block.1} parent=43 // pred_fallthru
        _
    $region44: #{residual_block.1} parent=5 // pred_fallthru
      _
    %p736 = scmp.le.s32.totalorder 2, %s12
    // Predicated region
    $region49: #{residual_block.1} parent=5 // pred_check
      %p737 = pneg %p736
    $region50: #{residual_block.1} parent=5 // pred_check_branch
      %739 = sbr.rel (%p737) target = $region52
    $region51: #{residual_block.1} parent=5 // pred_region
      %s740 = ssub.s32 %s12, 2
      // Predicated region
      $region53: #{residual_block.1} parent=51 // pred_check
        %p741 = pneg %p172
      $region54: #{residual_block.1} parent=51 // pred_check_branch
        %743 = sbr.rel (%p741) target = $region56
      $region55: #{residual_block.1} parent=51 // pred_region
        %p744 = scmp.lt.s32.totalorder %s18, 1
        %s745 = scalar_select %p744, %s18, 1
        %s746 = smul.addr %s745, 2
        %s747 = smul.addr %s746, 8
        %s748 = scalar_lea.vmem %s6, %s747
      $region56: #{residual_block.1} parent=51 // pred_fallthru
        _
    $region52: #{residual_block.1} parent=5 // pred_fallthru
      _
  $region6: #{residual_block.1} parent=0 // loop_footer
    %s16 = sadd.s32 1, %s12
  $region7: #{residual_block.1} parent=0 // loop_footer_branch
    %11 = sbr.rel target = $region3
  $region8: #{residual_block.1} parent=0 // loop_exit
    _

</llo_original>
